<compile_context>
chip_gen: v5e
topology: v5e:2x2
jax: 0.10.0
libtpu: 0.0.40
codegen_flags: <defaults>
</compile_context>

<pallas_src>
import functools
import math

import jax
import jax.numpy as jnp
from jax import lax
from jax.experimental import pallas as pl
from jax.experimental.pallas import tpu as pltpu


def _round_up(x, m):
    return (x + m - 1) // m * m


def _vmem_capacity_bytes():
    # Per-generation VMEM (v5e/v6e: 128 MiB, v7x: 64 MiB per TensorCore).
    # Fall back to the smallest (v7x) if the query is unavailable.
    try:
        return int(pltpu.get_tpu_info().vmem_capacity_bytes)
    except Exception:  # pragma: no cover - conservative fallback
        return 64 * 1024 * 1024


def _choose_row_tile(n_rows, C, itemsize, vmem_cap):
    """Pick the row tile TS for (TS, C) input blocks."""
    c_pad = _round_up(C, 128)  # lane padding: real VMEM width of a block row
    # 2 inputs x 2 pipeline buffers must fit with headroom (output + scratch).
    budget = min(vmem_cap // 3, 48 * 1024 * 1024)
    # ~2 MiB per input block per step: large enough to amortize the ~0.35us
    # per-grid-step overhead and approach HBM roofline.
    target = 2 * 1024 * 1024
    ts = max(128, target // (c_pad * itemsize))
    ts = _round_up(ts, 128)
    # Honor the double-buffered, lane-padded footprint.
    while ts > 128 and 4 * ts * c_pad * itemsize > budget:
        ts //= 2
    ts = max(128, _round_up(ts, 128))
    if n_rows > 256:
        # Keep >=2 grid steps so v7x can shard the "parallel" axis over both
        # TensorCores; neutral on single-TC v5e/v6e.
        ts = min(ts, _round_up(pl.cdiv(n_rows, 2), 128))
    else:
        ts = min(ts, 128)
    if ts >= n_rows:
        ts = n_rows  # single full block: no ragged handling, exact out width
    return ts


def _lp_distance_kernel(pred_ref, true_ref, out_ref, *, p):
    pred = pred_ref[...]  # (TS, C)
    true = true_ref[...]  # (TS, C)
    C = pred.shape[-1]

    # First-occurrence argmax over the last (lane) axis -- matches
    # torch.argmax tie-breaking: among positions equal to the max, take the
    # smallest index.
    iota = lax.broadcasted_iota(jnp.int32, pred.shape, 1)

    def argmax_last(x):
        m = jnp.max(x, axis=-1, keepdims=True)
        idx = jnp.where(x == m, iota, jnp.int32(C))
        return jnp.min(idx, axis=-1)  # (TS,)

    a_pred = argmax_last(pred)
    a_true = argmax_last(true)

    diff = jnp.abs(a_pred - a_true).astype(jnp.float32)
    if float(p).is_integer():
        val = lax.integer_pow(diff, int(p))  # exact, VPU-only
    else:
        val = diff ** jnp.float32(p)         # EUP exp/log path for non-integer p
    out_ref[...] = (val / jnp.float32(C - 1)).reshape(out_ref.shape)


def regression_lp_distance(pred, true, p=2.0):
    """pred, true: (..., C).  Returns (...,) float32."""
    assert pred.shape == true.shape, (pred.shape, true.shape)
    *lead, C = pred.shape
    assert C >= 2, "need at least 2 classes / regression bins"

    n = math.prod(lead) if lead else 1
    pred2 = pred.reshape(n, C)   # free reshape, no data movement
    true2 = true.reshape(n, C)

    itemsize = pred2.dtype.itemsize
    vmem_cap = _vmem_capacity_bytes()
    ts = _choose_row_tile(n, C, itemsize, vmem_cap)
    n_tiles = pl.cdiv(n, ts)

    kernel = functools.partial(_lp_distance_kernel, p=float(p))
    out = pl.pallas_call(
        kernel,
        grid=(n_tiles,),
        out_shape=jax.ShapeDtypeStruct((1, n), jnp.float32),
        in_specs=[
            pl.BlockSpec((ts, C), lambda i: (i, 0)),
            pl.BlockSpec((ts, C), lambda i: (i, 0)),
        ],
        out_specs=pl.BlockSpec((1, ts), lambda i: (0, i)),
        compiler_params=pltpu.CompilerParams(
            dimension_semantics=("parallel",),
            vmem_limit_bytes=int(min(vmem_cap * 3 // 4, 96 * 1024 * 1024)),
        ),
        cost_estimate=pl.CostEstimate(
            flops=int(6 * n * C),
            transcendentals=0 if float(p).is_integer() else int(2 * n),
            bytes_accessed=int(2 * n * C * itemsize + n * 4),
        ),
    )(pred2, true2)

    return out.reshape(tuple(lead))


if __name__ == "__main__":
    key = jax.random.PRNGKey(0)
    k1, k2, k3, k4 = jax.random.split(key, 4)

    # Small shape consistent with the module: (batch, seq, classes).
    B, S, C = 2, 8, 32
    pred = jax.random.normal(k1, (B, S, C), dtype=jnp.float32)
    true = jax.random.normal(k2, (B, S, C), dtype=jnp.float32)

    out = regression_lp_distance(pred, true, p=2.0)
    jax.block_until_ready(out)
    ref = (
        jnp.abs(jnp.argmax(pred, axis=-1) - jnp.argmax(true, axis=-1)).astype(jnp.float32)
        ** 2
    ) / (C - 1)
    assert out.shape == (B, S), out.shape
    assert jnp.allclose(out, ref, rtol=1e-5, atol=1e-6), (out, ref)

    # Ragged grid: n = 1200 rows -> 2 uneven blocks (no wrapper padding),
    # plus integer p = 3.
    B2, S2, C2 = 3, 400, 48
    pred_b = jax.random.normal(k3, (B2, S2, C2), dtype=jnp.float32)
    true_b = jax.random.normal(k4, (B2, S2, C2), dtype=jnp.float32)
    out_b = regression_lp_distance(pred_b, true_b, p=3.0)
    jax.block_until_ready(out_b)
    ref_b = (
        jnp.abs(jnp.argmax(pred_b, axis=-1) - jnp.argmax(true_b, axis=-1)).astype(jnp.float32)
        ** 3
    ) / (C2 - 1)
    assert out_b.shape == (B2, S2), out_b.shape
    assert jnp.allclose(out_b, ref_b, rtol=1e-5, atol=1e-5), (out_b, ref_b)

    # Non-integer p exercises the float-pow (EUP) path.
    out_c = regression_lp_distance(pred, true, p=1.5)
    jax.block_until_ready(out_c)
    ref_c = (
        jnp.abs(jnp.argmax(pred, axis=-1) - jnp.argmax(true, axis=-1)).astype(jnp.float32)
        ** 1.5
    ) / (C - 1)
    assert jnp.allclose(out_c, ref_c, rtol=1e-5, atol=1e-5), (out_c, ref_c)

    print("KERNEL_OK")
</pallas_src>

<mosaic_0001>
module attributes {stable_mosaic.version = 11 : i64} {
  func.func @_lp_distance_kernel(%arg0: i32, %arg1: memref<16x32xf32, #tpu.memory_space<vmem>>, %arg2: memref<16x32xf32, #tpu.memory_space<vmem>>, %arg3: memref<1x16xf32, #tpu.memory_space<vmem>>) attributes {dimension_semantics = [#tpu.dimension_semantics<parallel>], iteration_bounds = array<i64: 1>, scalar_prefetch = 0 : i64, scratch_operands = 0 : i64, tpu.core_type = #tpu.core_type<tc>, window_params = [{transform_indices = @transform_0, window_bounds = array<i64: 16, 32>}, {transform_indices = @transform_1, window_bounds = array<i64: 16, 32>}, {transform_indices = @transform_2, window_bounds = array<i64: 1, 16>}]} {
    %c0 = arith.constant 0 : index
    %c0_0 = arith.constant 0 : index
    %0 = vector.load %arg1[%c0, %c0_0] : memref<16x32xf32, #tpu.memory_space<vmem>>, vector<16x32xf32>
    %c0_1 = arith.constant 0 : index
    %c0_2 = arith.constant 0 : index
    %1 = vector.load %arg2[%c0_1, %c0_2] : memref<16x32xf32, #tpu.memory_space<vmem>>, vector<16x32xf32>
    %2 = tpu.iota {dimensions = array<i32: 1>} : vector<16x32xi32>
    %cst = arith.constant dense<0xFF800000> : vector<16xf32>
    %3 = vector.multi_reduction <maximumf>, %0, %cst [1] : vector<16x32xf32> to vector<16xf32>
    %4 = vector.shape_cast %3 : vector<16xf32> to vector<16x1xf32>
    %5 = vector.broadcast %4 : vector<16x1xf32> to vector<16x32xf32>
    %6 = arith.cmpf oeq, %0, %5 : vector<16x32xf32>
    %c32_i32 = arith.constant 32 : i32
    %7 = vector.broadcast %c32_i32 : i32 to vector<16x32xi32>
    %8 = arith.select %6, %2, %7 : vector<16x32xi1>, vector<16x32xi32>
    %cst_3 = arith.constant dense<2147483647> : vector<16xi32>
    %9 = vector.multi_reduction <minsi>, %8, %cst_3 [1] : vector<16x32xi32> to vector<16xi32>
    %cst_4 = arith.constant dense<0xFF800000> : vector<16xf32>
    %10 = vector.multi_reduction <maximumf>, %1, %cst_4 [1] : vector<16x32xf32> to vector<16xf32>
    %11 = vector.shape_cast %10 : vector<16xf32> to vector<16x1xf32>
    %12 = vector.broadcast %11 : vector<16x1xf32> to vector<16x32xf32>
    %13 = arith.cmpf oeq, %1, %12 : vector<16x32xf32>
    %c32_i32_5 = arith.constant 32 : i32
    %14 = vector.broadcast %c32_i32_5 : i32 to vector<16x32xi32>
    %15 = arith.select %13, %2, %14 : vector<16x32xi1>, vector<16x32xi32>
    %cst_6 = arith.constant dense<2147483647> : vector<16xi32>
    %16 = vector.multi_reduction <minsi>, %15, %cst_6 [1] : vector<16x32xi32> to vector<16xi32>
    %17 = arith.subi %9, %16 : vector<16xi32>
    %18 = math.absi %17 : vector<16xi32>
    %19 = arith.sitofp %18 : vector<16xi32> to vector<16xf32>
    %20 = arith.mulf %19, %19 : vector<16xf32>
    %cst_7 = arith.constant 3.100000e+01 : f32
    %21 = vector.broadcast %cst_7 : f32 to vector<16xf32>
    %22 = arith.divf %20, %21 : vector<16xf32>
    %23 = vector.shape_cast %22 : vector<16xf32> to vector<1x16xf32>
    %c0_8 = arith.constant 0 : index
    %c0_9 = arith.constant 0 : index
    %24 = vector.load %arg3[%c0_8, %c0_9] : memref<1x16xf32, #tpu.memory_space<vmem>>, vector<1x16xf32>
    tpu.vector_store %arg3[%c0_8, %c0_9], %23 {strides = array<i32>} : memref<1x16xf32, #tpu.memory_space<vmem>>, vector<1x16xf32>,
    return
  }
  func.func @transform_0(%arg0: i32) -> (i32, i32) {
    %c0_i32 = arith.constant 0 : i32
    %c0_i32_0 = arith.constant 0 : i32
    return %arg0, %c0_i32 : i32, i32
  }
  func.func @transform_1(%arg0: i32) -> (i32, i32) {
    %c0_i32 = arith.constant 0 : i32
    %c0_i32_0 = arith.constant 0 : i32
    return %arg0, %c0_i32 : i32, i32
  }
  func.func @transform_2(%arg0: i32) -> (i32, i32) {
    %c0_i32 = arith.constant 0 : i32
    %c0_i32_0 = arith.constant 0 : i32
    return %c0_i32, %arg0 : i32, i32
  }
}

</mosaic_0001>

<llo_original>
// kernel: tpu_custom_call.1
$region0: #{tpu_custom_call.1}
  #allocation0 [shape = 'u32[]', space=smem, size = 0x4, offset = 0x4, fixed_abs, tag = 'smem constant byte address 0x4 - core index']
  #allocation1 [shape = 'u32[72,128]{1,0:T(1,128)}', space=vmem, size = 0x9000, scoped, tag = 'internal scratch']
  %s0 = inlined_call_operand.hbm [shape: f32[16,32], index: 0, kind: input, shape index: {}]
  %s1 = inlined_call_operand.hbm [shape: f32[16,32], index: 1, kind: input, shape index: {}]
  %s2 = inlined_call_operand.hbm [shape: f32[1,16], index: 2, kind: output, shape index: {}]
  %s3 = sld [smem:[#allocation0]]
  $region26: #{tpu_custom_call.1} parent=0
    _
  %s5 = ssub.s32 1, %s3
  %s6 = scalar_select 0, %s5, %s3
  $region1: #{tpu_custom_call.1} parent=0
    #allocation2 [shape = 'u8[8192]{0}', space=vmem, size = 0x2000, scoped, tag = 'input window, operand 0, single buffered']
    #allocation3 [shape = 's32[1]{0}', space=sflag, size = 0x4, scoped, tag = 'scoped memory for tpu_custom_call.1']
    #allocation4 [shape = 's32[1]{0}', space=sflag, size = 0x4, scoped, tag = 'scoped memory for tpu_custom_call.1']
    #allocation5 [shape = 'u8[8192]{0}', space=vmem, size = 0x2000, scoped, tag = 'input window, operand 1, single buffered']
    #allocation6 [shape = 's32[1]{0}', space=sflag, size = 0x4, scoped, tag = 'scoped memory for tpu_custom_call.1']
    #allocation7 [shape = 'u8[512]{0}', space=vmem, size = 0x400, scoped, tag = 'output window, operand 0, single buffered']
    %7 = vsyncpa [#allocation3], 0
    %8 = vsyncpa [#allocation6], 0
    %9 = vsyncpa [#allocation4], 0
    // Predicated region
    $region2: #{tpu_custom_call.1} parent=1 // pred_check
      _
    $region3: #{tpu_custom_call.1} parent=1 // pred_check_branch
      %11 = sbr.rel (0) target = $region5
    $region4: #{tpu_custom_call.1} parent=1 // pred_region
      %13 = vsyncadd [#allocation3], 0
      %s14 = sshll.u32 %s0, 4
      %s15 = int_to_ptr.hbm [resolvable:$true] %s14
      %s16 = sshll.u32 [#allocation2], 4
      %s17 = int_to_ptr.vmem [resolvable:$true] %s16
      %22 = dma.hbm_to_vmem [thread:$0]  %s15, 256, %s17, [#allocation3], 128, 128, 8
    $region5: #{tpu_custom_call.1} parent=1 // pred_fallthru
      _
    // Predicated region
    $region6: #{tpu_custom_call.1} parent=1 // pred_check
      _
    $region7: #{tpu_custom_call.1} parent=1 // pred_check_branch
      %24 = sbr.rel (0) target = $region9
    $region8: #{tpu_custom_call.1} parent=1 // pred_region
      %26 = vsyncadd [#allocation6], 0
      %s27 = sshll.u32 %s1, 4
      %s28 = int_to_ptr.hbm [resolvable:$true] %s27
      %s29 = sshll.u32 [#allocation5], 4
      %s30 = int_to_ptr.vmem [resolvable:$true] %s29
      %35 = dma.hbm_to_vmem [thread:$0]  %s28, 256, %s30, [#allocation6], 128, 128, 8
    $region9: #{tpu_custom_call.1} parent=1 // pred_fallthru
      _
    // Predicated region
    $region10: #{tpu_custom_call.1} parent=1 // pred_check
      _
    $region11: #{tpu_custom_call.1} parent=1 // pred_check_branch
      %37 = sbr.rel (0) target = $region13
    $region12: #{tpu_custom_call.1} parent=1 // pred_region
      %39 = dma.done [#allocation3], 256
    $region13: #{tpu_custom_call.1} parent=1 // pred_fallthru
      _
    // Predicated region
    $region14: #{tpu_custom_call.1} parent=1 // pred_check
      _
    $region15: #{tpu_custom_call.1} parent=1 // pred_check_branch
      %41 = sbr.rel (0) target = $region17
    $region16: #{tpu_custom_call.1} parent=1 // pred_region
      %43 = dma.done [#allocation6], 256
    $region17: #{tpu_custom_call.1} parent=1 // pred_fallthru
      _
    %v44 = vld [vmem:[#allocation2] sm:$0xff]
    %v45 = vld [vmem:[#allocation2 + $0x8] sm:$0xff]
    %v46 = vld [vmem:[#allocation5] sm:$0xff]
    %v47 = vld [vmem:[#allocation5 + $0x8] sm:$0xff]
    %v48 = vlaneseq
    %v49 = vand.u32 %v48, 127
    %vm50 = vcmask 261120
    %v51 = vsel %vm50, %v44, -inf
    %52 = vmax.xlane.f32.xlu0 %v51
    %v53 = vpop.xlane.xlu0 %52
    %v54 = vsel %vm50, %v45, -inf
    %55 = vmax.xlane.f32.xlu0 %v54
    %v56 = vpop.xlane.xlu0 %55
    %vm57 = vcmp.eq.f32.partialorder %v44, %v53
    %vm58 = vcmp.eq.f32.partialorder %v45, %v56
    %v59 = vsel %vm57, %v49, 32
    %v60 = vsel %vm58, %v49, 32
    %v61 = vsel %vm50, %v59, 2147483647
    %v62 = vand.u32 %v61, 65535
    %v63 = vshra.s32 %v61, 16
    %v64 = vcvt.s32.f32 %v62
    %v65 = vcvt.s32.f32 %v63
    %66 = vmin.xlane.f32.xlu0 %v65
    %v67 = vpop.xlane.xlu0 %66
    %vm68 = vcmp.eq.f32.partialorder %v65, %v67
    %v69 = vsel %vm68, %v64, inf
    %70 = vmin.xlane.f32.xlu0 %v69
    %v71 = vpop.xlane.xlu0 %70
    %v72 = vcvt.f32.s32 %v71
    %v73 = vcvt.f32.s32 %v67
    %v74 = vshll.u32 %v73, 16
    %v75 = vadd.s32 %v74, %v72
    %v76 = vsel %vm50, %v60, 2147483647
    %v77 = vand.u32 %v76, 65535
    %v78 = vshra.s32 %v76, 16
    %v79 = vcvt.s32.f32 %v77
    %v80 = vcvt.s32.f32 %v78
    %81 = vmin.xlane.f32.xlu0 %v80
    %v82 = vpop.xlane.xlu0 %81
    %vm83 = vcmp.eq.f32.partialorder %v80, %v82
    %v84 = vsel %vm83, %v79, inf
    %85 = vmin.xlane.f32.xlu0 %v84
    %v86 = vpop.xlane.xlu0 %85
    %v87 = vcvt.f32.s32 %v86
    %v88 = vcvt.f32.s32 %v82
    %v89 = vshll.u32 %v88, 16
    %v90 = vadd.s32 %v89, %v87
    %v91 = vsel %vm50, %v46, -inf
    %92 = vmax.xlane.f32.xlu0 %v91
    %v93 = vpop.xlane.xlu0 %92
    %v94 = vsel %vm50, %v47, -inf
    %95 = vmax.xlane.f32.xlu0 %v94
    %v96 = vpop.xlane.xlu0 %95
    %vm97 = vcmp.eq.f32.partialorder %v46, %v93
    %vm98 = vcmp.eq.f32.partialorder %v47, %v96
    %v99 = vsel %vm97, %v49, 32
    %v100 = vsel %vm98, %v49, 32
    %v101 = vsel %vm50, %v99, 2147483647
    %v102 = vand.u32 %v101, 65535
    %v103 = vshra.s32 %v101, 16
    %v104 = vcvt.s32.f32 %v102
    %v105 = vcvt.s32.f32 %v103
    %106 = vmin.xlane.f32.xlu0 %v105
    %v107 = vpop.xlane.xlu0 %106
    %vm108 = vcmp.eq.f32.partialorder %v105, %v107
    %v109 = vsel %vm108, %v104, inf
    %110 = vmin.xlane.f32.xlu0 %v109
    %v111 = vpop.xlane.xlu0 %110
    %v112 = vcvt.f32.s32 %v111
    %v113 = vcvt.f32.s32 %v107
    %v114 = vshll.u32 %v113, 16
    %v115 = vadd.s32 %v114, %v112
    %v116 = vsel %vm50, %v100, 2147483647
    %v117 = vand.u32 %v116, 65535
    %v118 = vshra.s32 %v116, 16
    %v119 = vcvt.s32.f32 %v117
    %v120 = vcvt.s32.f32 %v118
    %121 = vmin.xlane.f32.xlu0 %v120
    %v122 = vpop.xlane.xlu0 %121
    %vm123 = vcmp.eq.f32.partialorder %v120, %v122
    %v124 = vsel %vm123, %v119, inf
    %125 = vmin.xlane.f32.xlu0 %v124
    %v126 = vpop.xlane.xlu0 %125
    %v127 = vcvt.f32.s32 %v126
    %v128 = vcvt.f32.s32 %v122
    %v129 = vshll.u32 %v128, 16
    %v130 = vadd.s32 %v129, %v127
    %v131 = vsub.s32 %v75, %v115
    %v132 = vsub.s32 %v90, %v130
    %vm133 = vcmp.lt.s32.totalorder %v131, 0
    %v134 = vsub.s32 0, %v131
    %v135 = vsel %vm133, %v134, %v131
    %vm136 = vcmp.lt.s32.totalorder %v132, 0
    %v137 = vsub.s32 0, %v132
    %v138 = vsel %vm136, %v137, %v132
    %v139 = vcvt.s32.f32 %v135
    %v140 = vcvt.s32.f32 %v138
    %v141 = vmul.f32 %v139, %v139
    %v142 = vmul.f32 %v140, %v140
    %v143 = vrcp.pop 31.0
    %v144 = vmul.f32 31.0, %v143
    %v145 = vsub.f32 1.0, %v144
    %v146 = vmul.f32 %v143, %v145
    %v147 = vadd.f32 %v143, %v146
    %vm148 = vweird.f32 %v143
    %v149 = vsel %vm148, %v143, %v147
    %v150 = vmul.f32 %v141, %v149
    %v151 = vmul.f32 %v142, %v149
    %v154 = vperm.slane %v150, %v49
    %v155 = vadd.s32 %v49, 4294967288
    %v156 = vperm.slane %v151, %v155
    %vm157 = vcmask 130112
    %v158 = vsel %vm157, %v156, %v154
    %vm160 = vcmask 122880
    %161 = vst.msk [vmem:[#allocation7] sm:$0x1] %vm160, %v158
    // Predicated region
    $region18: #{tpu_custom_call.1} parent=1 // pred_check
      _
    $region19: #{tpu_custom_call.1} parent=1 // pred_check_branch
      %163 = sbr.rel (0) target = $region21
    $region20: #{tpu_custom_call.1} parent=1 // pred_region
      %165 = vsyncadd [#allocation4], 0
      %s167 = sshll.u32 [#allocation7], 4
      %s168 = int_to_ptr.vmem [resolvable:$true] %s167
      %s169 = sshll.u32 %s2, 4
      %s170 = int_to_ptr.hbm [resolvable:$true] %s169
      %172 = dma.vmem_to_hbm [thread:$0]  %s168, 16, %s170, [#allocation4]
    $region21: #{tpu_custom_call.1} parent=1 // pred_fallthru
      _
    // Predicated region
    $region22: #{tpu_custom_call.1} parent=1 // pred_check
      _
    $region23: #{tpu_custom_call.1} parent=1 // pred_check_branch
      %174 = sbr.rel (0) target = $region25
    $region24: #{tpu_custom_call.1} parent=1 // pred_region
      %176 = dma.done [#allocation4], 16
    $region25: #{tpu_custom_call.1} parent=1 // pred_fallthru
      _
    %177 = vsyncpa [#allocation3], 1
    %178 = vsyncpa [#allocation6], 1
    %179 = vsyncpa [#allocation4], 1

</llo_original>
